<compile_context>
chip_gen: v7x
topology: tpu7x:2x2x1
jax: 0.10.0
libtpu: 0.0.40
codegen_flags: <defaults>
</compile_context>

<pallas_src>
import functools

import jax
import jax.numpy as jnp
from jax.experimental import pallas as pl
from jax.experimental.pallas import tpu as pltpu


def _round_up(a, b):
    return (a + b - 1) // b * b


def _cosface_kernel(x_ref, w_ref, inv_wn_ref, label_ref, smargin_ref, out_ref,
                    *, tile_c):
    # x_ref:       [TILE_B, Dp]      bf16  rows pre-scaled by s/||x||
    # w_ref:       [TILE_C, Dp]      bf16  raw class weights (natural layout)
    # inv_wn_ref:  [1, TILE_C]       f32   1 / max(||w_row||, eps)
    # label_ref:   [TILE_B, 1]       i32
    # smargin_ref: [TILE_B, 1]       f32   s * margin
    # out_ref:     [TILE_B, TILE_C]  f32
    j = pl.program_id(0)  # C-tile index (OUTER grid axis -> W fetched once per j)

    # bf16 MXU matmul, f32 accumulation; contraction over the last dim of both
    # operands -> no transpose / relayout of the large W tile.
    dots = jax.lax.dot_general(
        x_ref[...], w_ref[...],
        dimension_numbers=(((1,), (1,)), ((), ())),
        preferred_element_type=jnp.float32)               # [TILE_B, TILE_C]

    # x is already scaled by s/||x||, so one rank-1 scale yields s*cosine.
    logits = dots * inv_wn_ref[...]

    tb, tc = logits.shape
    # Offset the label column by the tile origin instead of offsetting the iota.
    local_label = label_ref[...] - j * tile_c              # [TILE_B, 1]
    class_ids = jax.lax.broadcasted_iota(jnp.int32, (tb, tc), 1)
    is_target = class_ids == local_label                   # [TILE_B, TILE_C]

    out_ref[...] = jnp.where(is_target, logits - smargin_ref[...], logits
                             ).astype(out_ref.dtype)


def cosface_forward(x, weight, label, male, *, s=64.0, m_maj=0.35, m_min=0.35,
                    validation=False, tile_b=None, tile_c=None):
    """JAX/Pallas equivalent of CosFace.forward (margin-from-`male` semantics)."""
    B, D = x.shape
    C, D2 = weight.shape
    assert D == D2
    eps = jnp.float32(1e-12)  # F.normalize default eps (clamp on the norm)

    # ---- tile_b: multiple of 16 (bf16 sublane packing), cap 256 (fills the
    #      2x256^2 MXU on v6e/v7x and doubles flops per W byte vs 128).
    if tile_b is None:
        tile_b = min(_round_up(B, 16), 256)
    tile_b = _round_up(tile_b, 16)
    Bp = _round_up(B, tile_b)

    # ---- D padded once to a lane-dense multiple of 128 (MXU K utilization).
    Dp = max(_round_up(D, 128), 128)

    # ---- tile_c: VMEM-budget-aware; prefer a divisor of C so the W pad copy
    #      (an extra full HBM pass over W) can be skipped.
    if tile_c is None:
        budget = 40 * 1024 * 1024                 # double-buffered working set
        per_col = 4 * Dp + 8 * tile_b + 8         # 2x W(bf16) + 2x out(f32) + inv_wn
        fixed = 4 * tile_b * Dp                   # 2x x(bf16)
        cap = max((budget - fixed) // per_col, 128)
        cap = min(cap // 128 * 128, 2048, _round_up(C, 128))
        tile_c = cap
        if C % 128 == 0:
            for t in range(cap, 0, -128):
                if C % t == 0:
                    tile_c = t
                    break
    tile_c = _round_up(tile_c, 128)
    Cp = _round_up(C, tile_c)

    # ---- fold normalization and s into x (B*D work) so the kernel applies only
    #      the 1/||w|| rank-1 scale.  (Algebraic reduction of B*C kernel work.)
    x = x.astype(jnp.float32)
    inv_xn = jnp.float32(s) / jnp.maximum(
        jnp.sqrt(jnp.sum(x * x, axis=1, keepdims=True)), eps)          # [B, 1]
    x_scaled = (x * inv_xn).astype(jnp.bfloat16)

    # ---- single bf16 cast of W; norms computed from the same bf16 copy (half the
    #      HBM bytes of an extra f32 pass, self-consistent with the MXU operand).
    w_bf = weight.astype(jnp.bfloat16)
    w_sq = jnp.sum(jnp.square(w_bf.astype(jnp.float32)), axis=1, keepdims=True)
    inv_wn = (1.0 / jnp.maximum(jnp.sqrt(w_sq), eps)).reshape(1, C)    # [1, C]

    m_min_eff = m_maj if validation else m_min
    male_f = male.reshape(B).astype(jnp.float32)
    smargin = (jnp.float32(s) *
               jnp.where(male_f == 1.0, jnp.float32(m_maj),
                         jnp.where(male_f == -1.0, jnp.float32(m_min_eff),
                                   jnp.float32(0.0)))).reshape(B, 1)   # [B, 1]
    label2d = label.reshape(B, 1).astype(jnp.int32)

    # ---- padding: full-W copy only when C/D do not already align.
    if Bp != B or Dp != D:
        x_scaled = jnp.pad(x_scaled, ((0, Bp - B), (0, Dp - D)))
    if Cp != C or Dp != D:
        w_bf = jnp.pad(w_bf, ((0, Cp - C), (0, Dp - D)))
    if Cp != C:
        inv_wn = jnp.pad(inv_wn, ((0, 0), (0, Cp - C)))
    if Bp != B:
        label2d = jnp.pad(label2d, ((0, Bp - B), (0, 0)))
        smargin = jnp.pad(smargin, ((0, Bp - B), (0, 0)))

    kernel = functools.partial(_cosface_kernel, tile_c=tile_c)
    grid = (Cp // tile_c, Bp // tile_b)   # C OUTER -> each W tile DMA'd exactly once

    # Explicit VMEM budget: double-buffered W + x + out + scalars, with headroom.
    vmem_need = (2 * tile_c * Dp * 2 + 2 * tile_b * Dp * 2
                 + 2 * tile_b * tile_c * 4 + 2 * tile_c * 4 + 4 * tile_b * 8)
    vmem_limit = int(min(60 * 1024 * 1024,
                         max(vmem_need + (4 << 20), 32 * 1024 * 1024)))

    out_p = pl.pallas_call(
        kernel,
        out_shape=jax.ShapeDtypeStruct((Bp, Cp), jnp.float32),
        grid=grid,
        in_specs=[
            pl.BlockSpec((tile_b, Dp), lambda j, i: (i, 0)),   # x (bf16, small)
            pl.BlockSpec((tile_c, Dp), lambda j, i: (j, 0)),   # W: outer axis only
            pl.BlockSpec((1, tile_c), lambda j, i: (0, j)),    # 1/||w||
            pl.BlockSpec((tile_b, 1), lambda j, i: (i, 0)),    # label
            pl.BlockSpec((tile_b, 1), lambda j, i: (i, 0)),    # s*margin
        ],
        out_specs=pl.BlockSpec((tile_b, tile_c), lambda j, i: (i, j)),
        compiler_params=pltpu.CompilerParams(
            dimension_semantics=("parallel", "parallel"),
            vmem_limit_bytes=vmem_limit),
        cost_estimate=pl.CostEstimate(
            flops=2 * Bp * Cp * Dp,
            bytes_accessed=(2 * Cp * Dp + 2 * Bp * Dp * (Cp // tile_c)
                            + 4 * Bp * Cp),
            transcendentals=0),
    )(x_scaled, w_bf, inv_wn, label2d, smargin)

    return out_p[:B, :C], 0.0


def _reference(x, weight, label, male, *, s, m_maj, m_min, validation):
    eps = 1e-12
    xn = x / jnp.maximum(jnp.linalg.norm(x, axis=1, keepdims=True), eps)
    wn = weight / jnp.maximum(jnp.linalg.norm(weight, axis=1, keepdims=True), eps)
    cosine = xn @ wn.T
    m_min_eff = m_maj if validation else m_min
    m = jnp.where(male == 1, m_maj, jnp.where(male == -1, m_min_eff, 0.0))
    phi = cosine - m[:, None]
    one_hot = jax.nn.one_hot(label, weight.shape[0], dtype=jnp.float32)
    return s * (one_hot * phi + (1.0 - one_hot) * cosine)


if __name__ == "__main__":
    # Small demo shapes; tile_b/tile_c chosen to force a real (3, 2) grid with
    # padded tail rows (B=24 -> padded to 32) and D padded 32 -> 128.
    B, in_features, out_features = 24, 32, 384
    s, m_maj, m_min = 64.0, 0.35, 0.35

    key = jax.random.PRNGKey(0)
    kx, kw, kl, km = jax.random.split(key, 4)

    x = jax.random.normal(kx, (B, in_features), dtype=jnp.float32)

    # xavier_uniform_ init for weight [out_features, in_features]
    bound = jnp.sqrt(6.0 / (in_features + out_features))
    weight = jax.random.uniform(kw, (out_features, in_features),
                                dtype=jnp.float32, minval=-bound, maxval=bound)

    label = jax.random.randint(kl, (B,), 0, out_features, dtype=jnp.int32)
    male = jnp.where(jax.random.bernoulli(km, 0.5, (B,)), 1.0, -1.0).astype(
        jnp.float32)

    out, aux = cosface_forward(x, weight, label, male,
                               s=s, m_maj=m_maj, m_min=m_min, validation=False,
                               tile_b=16, tile_c=128)
    out = jax.block_until_ready(out)

    ref = _reference(x, weight, label, male,
                     s=s, m_maj=m_maj, m_min=m_min, validation=False)
    assert out.shape == (B, out_features)
    # bf16 MXU inputs vs f32 reference: worst-case cosine error ~2^-8, times s=64.
    max_err = float(jnp.max(jnp.abs(out - ref)))
    assert max_err < 0.5, f"mismatch vs reference, max abs err {max_err}"
    assert aux == 0.0
    print("KERNEL_OK")
</pallas_src>

<mosaic_0001>
module attributes {stable_mosaic.version = 11 : i64} {
  func.func @_cosface_kernel(%arg0: i32, %arg1: i32, %arg2: memref<16x128xbf16, #tpu.memory_space<vmem>>, %arg3: memref<128x128xbf16, #tpu.memory_space<vmem>>, %arg4: memref<1x128xf32, #tpu.memory_space<vmem>>, %arg5: memref<16x1xi32, #tpu.memory_space<vmem>>, %arg6: memref<16x1xf32, #tpu.memory_space<vmem>>, %arg7: memref<16x128xf32, #tpu.memory_space<vmem>>) attributes {dimension_semantics = [#tpu.dimension_semantics<parallel>, #tpu.dimension_semantics<parallel>], iteration_bounds = array<i64: 3, 2>, scalar_prefetch = 0 : i64, scratch_operands = 0 : i64, tpu.core_type = #tpu.core_type<tc>, window_params = [{transform_indices = @transform_0, window_bounds = array<i64: 16, 128>}, {transform_indices = @transform_1, window_bounds = array<i64: 128, 128>}, {transform_indices = @transform_2, window_bounds = array<i64: 1, 128>}, {transform_indices = @transform_3, window_bounds = array<i64: 16, 1>}, {transform_indices = @transform_4, window_bounds = array<i64: 16, 1>}, {transform_indices = @transform_5, window_bounds = array<i64: 16, 128>}]} {
    %c0 = arith.constant 0 : index
    %c0_0 = arith.constant 0 : index
    %0 = vector.load %arg2[%c0, %c0_0] : memref<16x128xbf16, #tpu.memory_space<vmem>>, vector<16x128xbf16>
    %c0_1 = arith.constant 0 : index
    %c0_2 = arith.constant 0 : index
    %1 = vector.load %arg3[%c0_1, %c0_2] : memref<128x128xbf16, #tpu.memory_space<vmem>>, vector<128x128xbf16>
    %cst = arith.constant dense<0.000000e+00> : vector<16x128xf32>
    %2 = tpu.matmul %0, %1, %cst {dimension_numbers = #tpu.dot_dimension_numbers<[1], [1], [0], [0], [0, 0, 1, 0], [], []>} : vector<16x128xbf16>, vector<128x128xbf16>, vector<16x128xf32> -> vector<16x128xf32>
    %c0_3 = arith.constant 0 : index
    %c0_4 = arith.constant 0 : index
    %3 = vector.load %arg4[%c0_3, %c0_4] : memref<1x128xf32, #tpu.memory_space<vmem>>, vector<1x128xf32>
    %4 = vector.broadcast %3 : vector<1x128xf32> to vector<16x128xf32>
    %5 = arith.mulf %2, %4 : vector<16x128xf32>
    %c0_5 = arith.constant 0 : index
    %c0_6 = arith.constant 0 : index
    %6 = vector.load %arg5[%c0_5, %c0_6] : memref<16x1xi32, #tpu.memory_space<vmem>>, vector<16x1xi32>
    %c128_i32 = arith.constant 128 : i32
    %7 = arith.muli %arg0, %c128_i32 : i32
    %8 = vector.broadcast %7 : i32 to vector<16x1xi32>
    %9 = arith.subi %6, %8 : vector<16x1xi32>
    %10 = tpu.iota {dimensions = array<i32: 1>} : vector<16x128xi32>
    %11 = vector.broadcast %9 : vector<16x1xi32> to vector<16x128xi32>
    %12 = arith.cmpi eq, %10, %11 : vector<16x128xi32>
    %c0_7 = arith.constant 0 : index
    %c0_8 = arith.constant 0 : index
    %13 = vector.load %arg6[%c0_7, %c0_8] : memref<16x1xf32, #tpu.memory_space<vmem>>, vector<16x1xf32>
    %14 = vector.broadcast %13 : vector<16x1xf32> to vector<16x128xf32>
    %15 = arith.subf %5, %14 : vector<16x128xf32>
    %16 = arith.select %12, %15, %5 : vector<16x128xi1>, vector<16x128xf32>
    %c0_9 = arith.constant 0 : index
    %c0_10 = arith.constant 0 : index
    %17 = vector.load %arg7[%c0_9, %c0_10] : memref<16x128xf32, #tpu.memory_space<vmem>>, vector<16x128xf32>
    tpu.vector_store %arg7[%c0_9, %c0_10], %16 {strides = array<i32>} : memref<16x128xf32, #tpu.memory_space<vmem>>, vector<16x128xf32>,
    return
  }
  func.func @transform_0(%arg0: i32, %arg1: i32) -> (i32, i32) {
    %c0_i32 = arith.constant 0 : i32
    %c0_i32_0 = arith.constant 0 : i32
    return %arg1, %c0_i32 : i32, i32
  }
  func.func @transform_1(%arg0: i32, %arg1: i32) -> (i32, i32) {
    %c0_i32 = arith.constant 0 : i32
    %c0_i32_0 = arith.constant 0 : i32
    return %arg0, %c0_i32 : i32, i32
  }
  func.func @transform_2(%arg0: i32, %arg1: i32) -> (i32, i32) {
    %c0_i32 = arith.constant 0 : i32
    %c0_i32_0 = arith.constant 0 : i32
    return %c0_i32, %arg0 : i32, i32
  }
  func.func @transform_3(%arg0: i32, %arg1: i32) -> (i32, i32) {
    %c0_i32 = arith.constant 0 : i32
    %c0_i32_0 = arith.constant 0 : i32
    return %arg1, %c0_i32 : i32, i32
  }
  func.func @transform_4(%arg0: i32, %arg1: i32) -> (i32, i32) {
    %c0_i32 = arith.constant 0 : i32
    %c0_i32_0 = arith.constant 0 : i32
    return %arg1, %c0_i32 : i32, i32
  }
  func.func @transform_5(%arg0: i32, %arg1: i32) -> (i32, i32) {
    %c0_i32 = arith.constant 0 : i32
    return %arg1, %arg0 : i32, i32
  }
}

</mosaic_0001>

<llo_original>
// kernel: tpu_custom_call.1
$region0: #{tpu_custom_call.1}
  #allocation0 [shape = 'u32[]', space=smem, size = 0x4, offset = 0x4, fixed_abs, tag = 'smem constant byte address 0x4 - core index']
  #allocation1 [shape = 'u32[144,128]{1,0:T(1,128)}', space=vmem, size = 0x12000, scoped, tag = 'internal scratch']
  %s0 = inlined_call_operand.vmem [shape: bf16[32,128], index: 0, kind: input, shape index: {}]
  %s1 = inlined_call_operand.hbm [shape: bf16[384,128], index: 1, kind: input, shape index: {}]
  %s2 = inlined_call_operand.vmem [shape: f32[1,384], index: 2, kind: input, shape index: {}]
  %s3 = inlined_call_operand.vmem [shape: s32[32,1], index: 3, kind: input, shape index: {}]
  %s4 = inlined_call_operand.vmem [shape: f32[32,1], index: 4, kind: input, shape index: {}]
  %s5 = inlined_call_operand.hbm [shape: f32[32,384], index: 5, kind: output, shape index: {}]
  %s6 = sld [smem:[#allocation0]]
  $region57: #{tpu_custom_call.1} parent=0
    _
  %s8 = ssub.s32 1, %s6
  %s9 = scalar_select 0, %s8, %s6
  $region1: #{tpu_custom_call.1} parent=0
    #allocation2 [shape = 'u8[65536]{0}', space=vmem, size = 0x10000, scoped, tag = 'input window, operand 1']
    #allocation3 [shape = 's32[2]{0}', space=sflag, size = 0x8, scoped, tag = 'scoped memory for tpu_custom_call.1']
    #allocation4 [shape = 's32[2]{0}', space=sflag, size = 0x8, scoped, tag = 'scoped memory for tpu_custom_call.1']
    #allocation5 [shape = 'u8[16384]{0}', space=vmem, size = 0x4000, scoped, tag = 'output window, operand 0']
    %10 = vsyncpa [#allocation3], 0
    %s11 = scalar_lea.sflag [#allocation3], 1
    %12 = vsyncpa %s11, 0
    %13 = vsyncpa [#allocation4], 0
    %s14 = scalar_lea.sflag [#allocation4], 1
    %15 = vsyncpa %s14, 0
    loop: start=0, step=1, limit=8
    $region2: #{tpu_custom_call.1} parent=1 // loop_pre_header
      _
    $region3: #{tpu_custom_call.1} parent=1 // loop_header
      %s17 = sphi 0, %s21
      %p18 = scmp.ge.s32.totalorder %s17, 8
      %s24 = sphi 0, %s36
      %s25 = sphi 0, %s32
      %s26 = sphi 0, %s24
      %s27 = sphi 0, %s25
      %s28 = sphi 0, %s26
      %s29 = sphi 0, %s27
      %s39 = sphi 0, %s41
      %s42 = sphi 0, %s39
      %s43 = sphi 0, %s42
      %s59 = sphi 0, %s43
      %s65 = sphi 0, %s67
      %s68 = sphi 0, %s65
      %s69 = sphi 0, %s68
      %s85 = sphi 0, %s69
      %s91 = sphi 0, %s93
      %s94 = sphi 0, %s91
      %s95 = sphi 0, %s94
      %s111 = sphi 0, %s95
      %s117 = sphi 0, %s119
      %s120 = sphi 0, %s117
      %s121 = sphi 0, %s120
      %s137 = sphi 0, %s121
      %s143 = sphi 0, %s145
      %s146 = sphi 0, %s143
      %s147 = sphi 0, %s146
      %s163 = sphi 0, %s147
      %s171 = sphi 0, %s173
      %s174 = sphi 0, %s171
      %s175 = sphi 0, %s174
      %s191 = sphi 0, %s175
    $region4: #{tpu_custom_call.1} parent=1 // loop_header_branch
      %20 = sbr.rel (%p18) target = $region8
    $region5: #{tpu_custom_call.1} parent=1 // loop_body
      %s22 = ssub.s32 %s17, 1
      %s23 = ssub.s32 %s17, 2
      %s30 = sadd.s32 1, %s25
      %p31 = scmp.ge.s32.totalorder %s30, 2
      %s32 = scalar_select %p31, 0, %s30
      %s33 = sadd.s32 1, %s24
      %s34 = scalar_select %p31, %s33, %s24
      %p35 = scmp.ge.s32.totalorder %s34, 3
      %s36 = scalar_select %p35, 0, %s34
      %s37 = ssub.s32 %s25, %s32
      %p38 = scmp.eq.s32.totalorder %s37, 0
      %s40 = sadd.s32 %s39, 1
      %s41 = scalar_select %p38, %s39, %s40
      %p44 = pneg %p38
      %p45 = scmp.eq.s32.totalorder %s17, 5
      %p46 = por %p44, %p45
      %p47 = scmp.ne.s32.totalorder %s39, %s42
      %p48 = scmp.eq.s32.totalorder %s17, 0
      %p49 = por %p47, %p48
      %p50 = scmp.ne.s32.totalorder %s39, %s42
      %p51 = scmp.eq.s32.totalorder %s22, 5
      %p52 = por %p50, %p51
      %p53 = scmp.ne.s32.totalorder %s42, %s43
      %p54 = scmp.eq.s32.totalorder %s22, 0
      %p55 = por %p53, %p54
      %p56 = scmp.ne.s32.totalorder %s42, %s43
      %p57 = scmp.eq.s32.totalorder %s23, 5
      %p58 = por %p56, %p57
      %p60 = scmp.ne.s32.totalorder %s43, %s59
      %p61 = scmp.eq.s32.totalorder %s23, 0
      %p62 = por %p60, %p61
      %s63 = ssub.s32 %s24, %s36
      %p64 = scmp.eq.s32.totalorder %s63, 0
      %s66 = sadd.s32 %s65, 1
      %s67 = scalar_select %p64, %s65, %s66
      %p70 = pneg %p64
      %p71 = scmp.eq.s32.totalorder %s17, 5
      %p72 = por %p70, %p71
      %p73 = scmp.ne.s32.totalorder %s65, %s68
      %p74 = scmp.eq.s32.totalorder %s17, 0
      %p75 = por %p73, %p74
      %p76 = scmp.ne.s32.totalorder %s65, %s68
      %p77 = scmp.eq.s32.totalorder %s22, 5
      %p78 = por %p76, %p77
      %p79 = scmp.ne.s32.totalorder %s68, %s69
      %p80 = scmp.eq.s32.totalorder %s22, 0
      %p81 = por %p79, %p80
      %p82 = scmp.ne.s32.totalorder %s68, %s69
      %p83 = scmp.eq.s32.totalorder %s23, 5
      %p84 = por %p82, %p83
      %p86 = scmp.ne.s32.totalorder %s69, %s85
      %p87 = scmp.eq.s32.totalorder %s23, 0
      %p88 = por %p86, %p87
      %s89 = ssub.s32 %s24, %s36
      %p90 = scmp.eq.s32.totalorder %s89, 0
      %s92 = sadd.s32 %s91, 1
      %s93 = scalar_select %p90, %s91, %s92
      %p96 = pneg %p90
      %p97 = scmp.eq.s32.totalorder %s17, 5
      %p98 = por %p96, %p97
      %p99 = scmp.ne.s32.totalorder %s91, %s94
      %p100 = scmp.eq.s32.totalorder %s17, 0
      %p101 = por %p99, %p100
      %p102 = scmp.ne.s32.totalorder %s91, %s94
      %p103 = scmp.eq.s32.totalorder %s22, 5
      %p104 = por %p102, %p103
      %p105 = scmp.ne.s32.totalorder %s94, %s95
      %p106 = scmp.eq.s32.totalorder %s22, 0
      %p107 = por %p105, %p106
      %p108 = scmp.ne.s32.totalorder %s94, %s95
      %p109 = scmp.eq.s32.totalorder %s23, 5
      %p110 = por %p108, %p109
      %p112 = scmp.ne.s32.totalorder %s95, %s111
      %p113 = scmp.eq.s32.totalorder %s23, 0
      %p114 = por %p112, %p113
      %s115 = ssub.s32 %s25, %s32
      %p116 = scmp.eq.s32.totalorder %s115, 0
      %s118 = sadd.s32 %s117, 1
      %s119 = scalar_select %p116, %s117, %s118
      %p122 = pneg %p116
      %p123 = scmp.eq.s32.totalorder %s17, 5
      %p124 = por %p122, %p123
      %p125 = scmp.ne.s32.totalorder %s117, %s120
      %p126 = scmp.eq.s32.totalorder %s17, 0
      %p127 = por %p125, %p126
      %p128 = scmp.ne.s32.totalorder %s117, %s120
      %p129 = scmp.eq.s32.totalorder %s22, 5
      %p130 = por %p128, %p129
      %p131 = scmp.ne.s32.totalorder %s120, %s121
      %p132 = scmp.eq.s32.totalorder %s22, 0
      %p133 = por %p131, %p132
      %p134 = scmp.ne.s32.totalorder %s120, %s121
      %p135 = scmp.eq.s32.totalorder %s23, 5
      %p136 = por %p134, %p135
      %p138 = scmp.ne.s32.totalorder %s121, %s137
      %p139 = scmp.eq.s32.totalorder %s23, 0
      %p140 = por %p138, %p139
      %s141 = ssub.s32 %s25, %s32
      %p142 = scmp.eq.s32.totalorder %s141, 0
      %s144 = sadd.s32 %s143, 1
      %s145 = scalar_select %p142, %s143, %s144
      %p148 = pneg %p142
      %p149 = scmp.eq.s32.totalorder %s17, 5
      %p150 = por %p148, %p149
      %p151 = scmp.ne.s32.totalorder %s143, %s146
      %p152 = scmp.eq.s32.totalorder %s17, 0
      %p153 = por %p151, %p152
      %p154 = scmp.ne.s32.totalorder %s143, %s146
      %p155 = scmp.eq.s32.totalorder %s22, 5
      %p156 = por %p154, %p155
      %p157 = scmp.ne.s32.totalorder %s146, %s147
      %p158 = scmp.eq.s32.totalorder %s22, 0
      %p159 = por %p157, %p158
      %p160 = scmp.ne.s32.totalorder %s146, %s147
      %p161 = scmp.eq.s32.totalorder %s23, 5
      %p162 = por %p160, %p161
      %p164 = scmp.ne.s32.totalorder %s147, %s163
      %p165 = scmp.eq.s32.totalorder %s23, 0
      %p166 = por %p164, %p165
      %s167 = ssub.s32 %s25, %s32
      %s168 = ssub.s32 %s24, %s36
      %s169 = sor.u32 %s167, %s168
      %p170 = scmp.eq.s32.totalorder %s169, 0
      %s172 = sadd.s32 %s171, 1
      %s173 = scalar_select %p170, %s171, %s172
      %p176 = pneg %p170
      %p177 = scmp.eq.s32.totalorder %s17, 5
      %p178 = por %p176, %p177
      %p179 = scmp.ne.s32.totalorder %s171, %s174
      %p180 = scmp.eq.s32.totalorder %s17, 0
      %p181 = por %p179, %p180
      %p182 = scmp.ne.s32.totalorder %s171, %s174
      %p183 = scmp.eq.s32.totalorder %s22, 5
      %p184 = por %p182, %p183
      %p185 = scmp.ne.s32.totalorder %s174, %s175
      %p186 = scmp.eq.s32.totalorder %s22, 0
      %p187 = por %p185, %p186
      %p188 = scmp.ne.s32.totalorder %s174, %s175
      %p189 = scmp.eq.s32.totalorder %s23, 5
      %p190 = por %p188, %p189
      %p192 = scmp.ne.s32.totalorder %s175, %s191
      %p193 = scmp.eq.s32.totalorder %s23, 0
      %p194 = por %p192, %p193
      %p195 = scmp.le.s32.totalorder 1, %s17
      %p196 = scmp.lt.s32.totalorder %s17, 7
      %p197 = pnand %p195, %p196
      %p198 = pneg %p197
      // Predicated region
      $region9: #{tpu_custom_call.1} parent=5 // pred_check
        _
      $region10: #{tpu_custom_call.1} parent=5 // pred_check_branch
        %200 = sbr.rel (%p197) target = $region12
      $region11: #{tpu_custom_call.1} parent=5 // pred_region
        %s201 = ssub.s32 %s17, 1
      $region12: #{tpu_custom_call.1} parent=5 // pred_fallthru
        _
      %p202 = scmp.lt.s32.totalorder %s17, 6
      // Predicated region
      $region13: #{tpu_custom_call.1} parent=5 // pred_check
        %p203 = pneg %p202
      $region14: #{tpu_custom_call.1} parent=5 // pred_check_branch
        %205 = sbr.rel (%p203) target = $region16
      $region15: #{tpu_custom_call.1} parent=5 // pred_region
        // Predicated region
        $region17: #{tpu_custom_call.1} parent=15 // pred_check
          %p206 = pneg %p49
        $region18: #{tpu_custom_call.1} parent=15 // pred_check_branch
          %208 = sbr.rel (%p206) target = $region20
        $region19: #{tpu_custom_call.1} parent=15 // pred_region
          %s209 = smul.u32 2, %s25
          %p210 = scmp.lt.s32.totalorder %s209, 3
          %s211 = scalar_select %p210, %s209, 3
          %s212 = smul.addr %s211, 4
          %s213 = scalar_lea.vmem %s0, %s212
          %s214 = smul.u32 2, %s25
        $region20: #{tpu_custom_call.1} parent=15 // pred_fallthru
          _
        // Predicated region
        $region21: #{tpu_custom_call.1} parent=15 // pred_check
          %p215 = pneg %p75
        $region22: #{tpu_custom_call.1} parent=15 // pred_check_branch
          %217 = sbr.rel (%p215) target = $region24
        $region23: #{tpu_custom_call.1} parent=15 // pred_region
          %s218 = sand.u32 %s65, 1
          %s219 = scalar_lea.sflag [#allocation3], %s218
          %s220 = sand.u32 %s65, 1
          %s221 = smul.addr %s220, 64
          %s222 = scalar_lea.vmem [#allocation2], %s221
          %s223 = smul.u32 16, %s24
          %s225 = ssub.s32 1024, 1024
          %226 = vsyncadd %s219, %s225
          %s227 = smul.addr %s223, 64
          %s228 = scalar_lea.hbm %s1, %s227
          %s229 = sshll.u32 %s222, 4
          %s230 = int_to_ptr.vmem [resolvable:$true] %s229
          %235 = dma.hbm_to_vmem [thread:$0]  %s228, 1024, %s230, %s219, 64, 64, 4
        $region24: #{tpu_custom_call.1} parent=15 // pred_fallthru
          _
        // Predicated region
        $region25: #{tpu_custom_call.1} parent=15 // pred_check
          %p236 = pneg %p101
        $region26: #{tpu_custom_call.1} parent=15 // pred_check_branch
          %238 = sbr.rel (%p236) target = $region28
        $region27: #{tpu_custom_call.1} parent=15 // pred_region
          %p239 = scmp.lt.s32.totalorder %s24, 2
          %s240 = scalar_select %p239, %s24, 2
          %s241 = scalar_lea.vmem %s2, %s240
        $region28: #{tpu_custom_call.1} parent=15 // pred_fallthru
          _
        // Predicated region
        $region29: #{tpu_custom_call.1} parent=15 // pred_check
          %p242 = pneg %p127
        $region30: #{tpu_custom_call.1} parent=15 // pred_check_branch
          %244 = sbr.rel (%p242) target = $region32
        $region31: #{tpu_custom_call.1} parent=15 // pred_region
          %s245 = smul.u32 2, %s25
          %p246 = scmp.lt.s32.totalorder %s245, 3
          %s247 = scalar_select %p246, %s245, 3
          %s248 = smul.addr %s247, 8
          %s249 = scalar_lea.vmem %s3, %s248
          %s250 = smul.u32 2, %s25
        $region32: #{tpu_custom_call.1} parent=15 // pred_fallthru
          _
        // Predicated region
        $region33: #{tpu_custom_call.1} parent=15 // pred_check
          %p251 = pneg %p153
        $region34: #{tpu_custom_call.1} parent=15 // pred_check_branch
          %253 = sbr.rel (%p251) target = $region36
        $region35: #{tpu_custom_call.1} parent=15 // pred_region
          %s254 = smul.u32 2, %s25
          %p255 = scmp.lt.s32.totalorder %s254, 3
          %s256 = scalar_select %p255, %s254, 3
          %s257 = smul.addr %s256, 8
          %s258 = scalar_lea.vmem %s4, %s257
          %s259 = smul.u32 2, %s25
        $region36: #{tpu_custom_call.1} parent=15 // pred_fallthru
          _
      $region16: #{tpu_custom_call.1} parent=5 // pred_fallthru
        _
      %p260 = scmp.le.s32.totalorder 1, %s17
      %p261 = scmp.lt.s32.totalorder %s17, 7
      %p262 = pnand %p260, %p261
      %p263 = pneg %p262
      // Predicated region
      $region37: #{tpu_custom_call.1} parent=5 // pred_check
        _
      $region38: #{tpu_custom_call.1} parent=5 // pred_check_branch
        %265 = sbr.rel (%p262) target = $region40
      $region39: #{tpu_custom_call.1} parent=5 // pred_region
        %s266 = ssub.s32 %s17, 1
        %s267 = sand.u32 %s68, 1
        %s268 = scalar_lea.sflag [#allocation3], %s267
        %s269 = sand.u32 %s68, 1
        %s270 = smul.addr %s269, 64
        %s271 = scalar_lea.vmem [#allocation2], %s270
        // Predicated region
        $region41: #{tpu_custom_call.1} parent=39 // pred_check
          %p272 = pneg %p81
        $region42: #{tpu_custom_call.1} parent=39 // pred_check_branch
          %274 = sbr.rel (%p272) target = $region44
        $region43: #{tpu_custom_call.1} parent=39 // pred_region
          %275 = dma.done %s268, 1024
        $region44: #{tpu_custom_call.1} parent=39 // pred_fallthru
          _
        %s276 = smul.u32 2, %s27
        %p277 = scmp.lt.s32.totalorder %s276, 3
        %s278 = scalar_select %p277, %s276, 3
        %s279 = smul.addr %s278, 4
        %s280 = scalar_lea.vmem %s0, %s279
        %p281 = pneg %p55
        %p282 = pneg %p52
        %s283 = sand.u32 %s68, 1
        %s284 = scalar_lea.sflag [#allocation3], %s283
        %s285 = sand.u32 %s68, 1
        %s286 = smul.addr %s285, 64
        %s287 = scalar_lea.vmem [#allocation2], %s286
        %p288 = pneg %p81
        %p289 = pneg %p78
        %p290 = scmp.lt.s32.totalorder %s26, 2
        %s291 = scalar_select %p290, %s26, 2
        %s292 = scalar_lea.vmem %s2, %s291
        %p293 = pneg %p107
        %p294 = pneg %p104
        %s295 = smul.u32 2, %s27
        %p296 = scmp.lt.s32.totalorder %s295, 3
        %s297 = scalar_select %p296, %s295, 3
        %s298 = smul.addr %s297, 8
        %s299 = scalar_lea.vmem %s3, %s298
        %p300 = pneg %p133
        %p301 = pneg %p130
        %s302 = smul.u32 2, %s27
        %p303 = scmp.lt.s32.totalorder %s302, 3
        %s304 = scalar_select %p303, %s302, 3
        %s305 = smul.addr %s304, 8
        %s306 = scalar_lea.vmem %s4, %s305
        %p307 = pneg %p159
        %p308 = pneg %p156
        %p309 = pneg %p187
        %p310 = pneg %p184
        %s311 = sand.u32 %s174, 1
        %s312 = scalar_lea.sflag [#allocation4], %s311
        %s313 = sand.u32 %s174, 1
        %s314 = smul.addr %s313, 16
        %s315 = scalar_lea.vmem [#allocation5], %s314
        %s316 = smul.u32 2, %s27
        %p317 = scmp.lt.s32.totalorder %s316, 3
        %s318 = scalar_select %p317, %s316, 3
        %s319 = smul.addr %s318, 4
        %s320 = scalar_lea.vmem %s0, %s319
        %s321 = smul.u32 2, %s27
        %s322 = smul.u32 16, %s26
        %p323 = scmp.lt.s32.totalorder %s26, 2
        %s324 = scalar_select %p323, %s26, 2
        %s325 = scalar_lea.vmem %s2, %s324
        %s326 = smul.u32 2, %s27
        %p327 = scmp.lt.s32.totalorder %s326, 3
        %s328 = scalar_select %p327, %s326, 3
        %s329 = smul.addr %s328, 8
        %s330 = scalar_lea.vmem %s3, %s329
        %s331 = smul.u32 2, %s27
        %s332 = smul.u32 2, %s27
        %p333 = scmp.lt.s32.totalorder %s332, 3
        %s334 = scalar_select %p333, %s332, 3
        %s335 = smul.addr %s334, 8
        %s336 = scalar_lea.vmem %s4, %s335
        %s337 = smul.u32 2, %s27
        %s338 = smul.u32 2, %s27
        %v340 = vld [vmem:[%s320] sm:$0xf]
        %v341 = vld [vmem:[%s320 + $0x4] sm:$0xf]
        %v342 = vld [vmem:[%s271] sm:$0xf]
        %v343 = vld [vmem:[%s271 + $0x4] sm:$0xf]
        %v344 = vld [vmem:[%s271 + $0x8] sm:$0xf]
        %v345 = vld [vmem:[%s271 + $0xc] sm:$0xf]
        %v346 = vld [vmem:[%s271 + $0x10] sm:$0xf]
        %v347 = vld [vmem:[%s271 + $0x14] sm:$0xf]
        %v348 = vld [vmem:[%s271 + $0x18] sm:$0xf]
        %v349 = vld [vmem:[%s271 + $0x1c] sm:$0xf]
        %v350 = vld [vmem:[%s271 + $0x20] sm:$0xf]
        %v351 = vld [vmem:[%s271 + $0x24] sm:$0xf]
        %v352 = vld [vmem:[%s271 + $0x28] sm:$0xf]
        %v353 = vld [vmem:[%s271 + $0x2c] sm:$0xf]
        %v354 = vld [vmem:[%s271 + $0x30] sm:$0xf]
        %v355 = vld [vmem:[%s271 + $0x34] sm:$0xf]
        %v356 = vld [vmem:[%s271 + $0x38] sm:$0xf]
        %v357 = vld [vmem:[%s271 + $0x3c] sm:$0xf]
        %v360 = vunpack.c.l.b16 %v340
        %v361 = vunpack.c.l.b16 %v341
        %v362 = vpack.c.b16 %v361, %v360
        %v380 = vunpack.c.l.b16 %v342
        %v381 = vunpack.c.l.b16 %v343
        %v382 = vunpack.c.l.b16 %v344
        %v383 = vunpack.c.l.b16 %v345
        %v384 = vunpack.c.l.b16 %v346
        %v385 = vunpack.c.l.b16 %v347
        %v386 = vunpack.c.l.b16 %v348
        %v387 = vunpack.c.l.b16 %v349
        %v388 = vunpack.c.l.b16 %v350
        %v389 = vunpack.c.l.b16 %v351
        %v390 = vunpack.c.l.b16 %v352
        %v391 = vunpack.c.l.b16 %v353
        %v392 = vunpack.c.l.b16 %v354
        %v393 = vunpack.c.l.b16 %v355
        %v394 = vunpack.c.l.b16 %v356
        %v395 = vunpack.c.l.b16 %v357
        %v396 = vpack.c.b16 %v381, %v380
        %v397 = vpack.c.b16 %v383, %v382
        %v398 = vpack.c.b16 %v385, %v384
        %v399 = vpack.c.b16 %v387, %v386
        %v400 = vpack.c.b16 %v389, %v388
        %v401 = vpack.c.b16 %v391, %v390
        %v402 = vpack.c.b16 %v393, %v392
        %v403 = vpack.c.b16 %v395, %v394
        %412 = vmatprep.subr.bf16.mxu0 0
        %413 = vmatpush1.bf16.xpose.msra.mxu0 %v396
        %414 = vmatprep.subr.bf16.mxu0 0
        %415 = vmatpush1.bf16.xpose.msra.mxu0 %v397
        %416 = vmatprep.subr.bf16.mxu0 0
        %417 = vmatpush1.bf16.xpose.msra.mxu0 %v398
        %418 = vmatprep.subr.bf16.mxu0 0
        %419 = vmatpush1.bf16.xpose.msra.mxu0 %v399
        %420 = vmatprep.subr.bf16.mxu0 0
        %421 = vmatpush1.bf16.xpose.msra.mxu0 %v400
        %422 = vmatprep.subr.bf16.mxu0 0
        %423 = vmatpush1.bf16.xpose.msra.mxu0 %v401
        %424 = vmatprep.subr.bf16.mxu0 0
        %425 = vmatpush1.bf16.xpose.msra.mxu0 %v402
        %426 = vmatprep.subr.bf16.mxu0 0
        %427 = vmatpush1.bf16.xpose.msra.mxu0 %v403
        %428 = vmatprep.subr.bf16.mxu0 0
        %429 = vmatpush1.bf16.xpose.msra.mxu0 0
        %430 = vmatprep.subr.bf16.mxu0 0
        %431 = vmatpush1.bf16.xpose.msra.mxu0 0
        %432 = vmatprep.subr.bf16.mxu0 0
        %433 = vmatpush1.bf16.xpose.msra.mxu0 0
        %434 = vmatprep.subr.bf16.mxu0 0
        %435 = vmatpush1.bf16.xpose.msra.mxu0 0
        %436 = vmatprep.subr.bf16.mxu0 0
        %437 = vmatpush1.bf16.xpose.msra.mxu0 0
        %438 = vmatprep.subr.bf16.mxu0 0
        %439 = vmatpush1.bf16.xpose.msra.mxu0 0
        %440 = vmatprep.subr.bf16.mxu0 0
        %441 = vmatpush1.bf16.xpose.msra.mxu0 0
        %442 = vmatprep.subr.bf16.mxu0 0
        %443 = vmatpush1.bf16.xpose.msra.mxu0 0
        %444 = vmatprep.mubr.bf16.mxu0 0
        %445 = vmatmul.mubr.bf16.gmra.mrb[0].mxu0 %v362
        %v446 = vpop.f32.mrb[0].mxu0
        %v447 = vadd.f32 0.0, %v446
        %v448 = vpop.f32.mrb[0].mxu0
        %v449 = vpop.f32.mrb[0].mxu0
        %v450 = vadd.f32 0.0, %v449
        %v451 = vpop.f32.mrb[0].mxu0
        %452 = vdwg.mxu0
        %v453 = vld [vmem:[%s325] sm:$0x1]
        %v455 = vlaneseq
        %v456 = vshrl.u32 %v455, 7
        %v457 = vsub.s32 0, %v456
        %v458 = vrot.slane %v453, %v457
        %v460 = vmul.f32 %v447, %v458
        %v461 = vmul.f32 %v450, %v458
        %v462 = vld [vmem:[%s330] sm:$0xff]
        %v463 = vld [vmem:[%s330 + $0x8] sm:$0xff]
        %s464 = smul.u32 %s26, 128
        %v465 = vstv %s464
        %v466 = vsub.s32 %v462, %v465
        %v467 = vsub.s32 %v463, %v465
        %v468 = vlaneseq
        %v469 = vand.u32 %v468, 127
        %470 = vset.pattern.permute.xlu0 0
        %471 = vperm.xlu0 %470, %v466
        %v472 = vpop.permute.xlu0 %471
        %473 = vset.pattern.permute.xlu0 0
        %474 = vperm.xlu0 %473, %v467
        %v475 = vpop.permute.xlu0 %474
        %vm476 = vcmp.eq.s32.totalorder %v469, %v472
        %vm477 = vcmp.eq.s32.totalorder %v469, %v475
        %v478 = vld [vmem:[%s336] sm:$0xff]
        %v479 = vld [vmem:[%s336 + $0x8] sm:$0xff]
        %481 = vset.pattern.permute.xlu0 0
        %482 = vperm.xlu0 %481, %v478
        %v483 = vpop.permute.xlu0 %482
        %486 = vset.pattern.permute.xlu0 0
        %487 = vperm.xlu0 %486, %v479
        %v488 = vpop.permute.xlu0 %487
        %v490 = vsub.f32 %v460, %v483
        %v491 = vsub.f32 %v461, %v488
        %v492 = vsel %vm476, %v490, %v460
        %v493 = vsel %vm477, %v491, %v461
        %494 = vst [vmem:[%s315] sm:$0xff] %v492
        %495 = vst [vmem:[%s315 + $0x8] sm:$0xff] %v493
        %s496 = sand.u32 %s174, 1
        %s497 = scalar_lea.sflag [#allocation4], %s496
        %s498 = sand.u32 %s174, 1
        %s499 = smul.addr %s498, 16
        %s500 = scalar_lea.vmem [#allocation5], %s499
        // Predicated region
        $region45: #{tpu_custom_call.1} parent=39 // pred_check
          %p501 = pneg %p184
        $region46: #{tpu_custom_call.1} parent=39 // pred_check_branch
          %503 = sbr.rel (%p501) target = $region48
        $region47: #{tpu_custom_call.1} parent=39 // pred_region
          %s504 = smul.u32 2, %s27
          %s506 = ssub.s32 256, 256
          %507 = vsyncadd %s497, %s506
          %s508 = smul.addr %s504, 3
          %s509 = sadd.s32 %s26, %s508
          %s510 = smul.addr %s509, 128
          %s511 = scalar_lea.hbm %s5, %s510
          %s512 = sshll.u32 %s500, 4
          %s513 = int_to_ptr.vmem [resolvable:$true] %s512
          %518 = dma.vmem_to_hbm [thread:$0]  %s513, 256, %s511, %s497, 128, 384, 8
        $region48: #{tpu_custom_call.1} parent=39 // pred_fallthru
          _
      $region40: #{tpu_custom_call.1} parent=5 // pred_fallthru
        _
      %p519 = scmp.le.s32.totalorder 2, %s17
      // Predicated region
      $region49: #{tpu_custom_call.1} parent=5 // pred_check
        %p520 = pneg %p519
      $region50: #{tpu_custom_call.1} parent=5 // pred_check_branch
        %522 = sbr.rel (%p520) target = $region52
      $region51: #{tpu_custom_call.1} parent=5 // pred_region
        %s523 = ssub.s32 %s17, 2
        // Predicated region
        $region53: #{tpu_custom_call.1} parent=51 // pred_check
          %p524 = pneg %p190
        $region54: #{tpu_custom_call.1} parent=51 // pred_check_branch
          %526 = sbr.rel (%p524) target = $region56
        $region55: #{tpu_custom_call.1} parent=51 // pred_region
          %s527 = sand.u32 %s175, 1
          %s528 = scalar_lea.sflag [#allocation4], %s527
          %s529 = sand.u32 %s175, 1
          %s530 = smul.addr %s529, 16
          %s531 = scalar_lea.vmem [#allocation5], %s530
          %532 = dma.done %s528, 256
        $region56: #{tpu_custom_call.1} parent=51 // pred_fallthru
          _
      $region52: #{tpu_custom_call.1} parent=5 // pred_fallthru
        _
    $region6: #{tpu_custom_call.1} parent=1 // loop_footer
      %s21 = sadd.s32 1, %s17
    $region7: #{tpu_custom_call.1} parent=1 // loop_footer_branch
      %16 = sbr.rel target = $region3
    $region8: #{tpu_custom_call.1} parent=1 // loop_exit
      _
    %533 = vsyncpa [#allocation3], 1
    %s534 = scalar_lea.sflag [#allocation3], 1
    %535 = vsyncpa %s534, 1
    %536 = vsyncpa [#allocation4], 1
    %s537 = scalar_lea.sflag [#allocation4], 1
    %538 = vsyncpa %s537, 1

</llo_original>
